<compile_context>
chip_gen: v5e
topology: v5e:2x2
jax: 0.10.0
libtpu: 0.0.40
codegen_flags: <defaults>
</compile_context>

<pallas_src>
import functools

import jax
import jax.numpy as jnp
from jax.experimental import pallas as pl
from jax.experimental.pallas import tpu as pltpu

# ----------------------------------------------------------------------------
# Tiling / compiler constants
# ----------------------------------------------------------------------------
try:
    _KIND = jax.devices()[0].device_kind.lower()
except Exception:       # pragma: no cover - keep import robust
    _KIND = ""
# v5e MXU is 128x128 -> 128-row tiles; v6e/v7x MXU is 256x256 -> 256-row tiles.
TM = 128 if ("v5e" in _KIND or "v5 lite" in _KIND) else 256
TN = 256
# Above the 16/32 MiB scoped defaults, below v7x's 64 MiB physical VMEM (headroom).
_VMEM_LIMIT = 48 * 1024 * 1024
BN_EPS = 1e-5   # PyTorch BatchNorm2d default eps

# Standard DARTS primitive table (genotype entries index into this list).
PRIMITIVES = ['none', 'max_pool_3x3', 'avg_pool_3x3', 'skip_connect',
              'sep_conv_3x3', 'sep_conv_5x5', 'dil_conv_3x3', 'dil_conv_5x5']


def _round_up(x, m):
    return (x + m - 1) // m * m


def _cparams(sem):
    return pltpu.CompilerParams(dimension_semantics=sem,
                                vmem_limit_bytes=_VMEM_LIMIT)


# ----------------------------------------------------------------------------
# Pallas kernels
# ----------------------------------------------------------------------------
def _matmul_kernel(x_ref, w_ref, s_ref, b_ref, *rest, pre_relu, has_add):
    """(maybe ReLU(x)) @ w  * scale + bias (+ add); bf16 MXU, f32 epilogue."""
    if has_add:
        add_ref, o_ref = rest
    else:
        (o_ref,) = rest
    x = x_ref[...]
    if pre_relu:
        x = jnp.maximum(x, 0.0)
    acc = jnp.dot(x.astype(jnp.bfloat16), w_ref[...],
                  preferred_element_type=jnp.float32)
    acc = acc * s_ref[...] + b_ref[...]
    if has_add:
        acc = acc + add_ref[...]
    o_ref[...] = acc


def _dwconv_kernel(x_ref, w_ref, o_ref, *, k, pre_relu):
    """Per-image depthwise conv: k*k-tap VPU MAC over the padded map."""
    Ho, Wo = o_ref.shape[1], o_ref.shape[2]
    x = x_ref[0]                     # (Hp, Wp, C)
    if pre_relu:
        x = jnp.maximum(x, 0.0)      # ReLU-then-pad == pad(0)-then-ReLU
    acc = None
    for dy in range(k):
        for dx in range(k):
            c = x[dy:dy + Ho, dx:dx + Wo, :] * w_ref[dy * k + dx]
            acc = c if acc is None else acc + c
    o_ref[0] = acc


def _maxpool_kernel(x_ref, o_ref, *, k):
    Ho, Wo = o_ref.shape[1], o_ref.shape[2]
    x = x_ref[0]                     # padded with -inf
    acc = None
    for dy in range(k):
        for dx in range(k):
            v = x[dy:dy + Ho, dx:dx + Wo, :]
            acc = v if acc is None else jnp.maximum(acc, v)
    o_ref[0] = acc


def _avgpool_kernel(x_ref, inv_ref, o_ref, *, k):
    Ho, Wo = o_ref.shape[1], o_ref.shape[2]
    x = x_ref[0]                     # padded with 0
    acc = None
    for dy in range(k):
        for dx in range(k):
            v = x[dy:dy + Ho, dx:dx + Wo, :]
            acc = v if acc is None else acc + v
    o_ref[0] = acc * inv_ref[0]      # count_include_pad=False divisors


def _gap_kernel(x_ref, o_ref):
    # x_ref block: (1, H*W, C) -> global mean over the spatial axis
    o_ref[0] = jnp.mean(x_ref[0], axis=0, keepdims=True)


# ----------------------------------------------------------------------------
# Pallas wrappers
# ----------------------------------------------------------------------------
def matmul_scale_bias(x, w, scale, bias, pre_relu=False, add=None):
    """out = (maybe ReLU(x)) @ w * scale + bias (+ add).

    x is f32 (cast to bf16 in-kernel), w is stored bf16, epilogue in f32.
    M and N are tiled; K stays resident (K <= 9*C in this network).  Partial
    boundary tiles are masked by Pallas -- no jnp.pad copies of x.
    """
    M, K = x.shape
    N = w.shape[1]
    tm = min(TM, _round_up(M, 8))
    tn = TN if N > TN else N
    grid = (pl.cdiv(M, tm), pl.cdiv(N, tn))
    in_specs = [pl.BlockSpec((tm, K), lambda i, j: (i, 0)),
                pl.BlockSpec((K, tn), lambda i, j: (0, j)),
                pl.BlockSpec((1, tn), lambda i, j: (0, j)),
                pl.BlockSpec((1, tn), lambda i, j: (0, j))]
    args = [x, w, scale.reshape(1, N), bias.reshape(1, N)]
    if add is not None:
        in_specs.append(pl.BlockSpec((tm, tn), lambda i, j: (i, j)))
        args.append(add)
    return pl.pallas_call(
        functools.partial(_matmul_kernel, pre_relu=pre_relu,
                          has_add=add is not None),
        out_shape=jax.ShapeDtypeStruct((M, N), jnp.float32),
        grid_spec=pltpu.PrefetchScalarGridSpec(
            num_scalar_prefetch=0, grid=grid,
            in_specs=in_specs,
            out_specs=pl.BlockSpec((tm, tn), lambda i, j: (i, j))),
        compiler_params=_cparams(("parallel", "parallel")),
    )(*args)


def conv1x1_bn(x, w, scale, bias, pre_relu=False, add=None):
    """1x1 conv + folded BN: plain reshape (no copy) into the matmul kernel."""
    N, H, W, Cin = x.shape
    add2 = None if add is None else add.reshape(N * H * W, -1)
    out = matmul_scale_bias(x.reshape(N * H * W, Cin), w, scale, bias,
                            pre_relu=pre_relu, add=add2)
    return out.reshape(N, H, W, w.shape[1])


def conv3x3_bn(x, wmat, scale, bias, stride, pre_relu=False):
    """Dense 3x3 conv (pad 1) + folded BN.  Only used for the three stem convs
    (tiny Cin), where the per-tap strided-slice slab is small in absolute bytes;
    every other conv in the network is 1x1 (pure matmul) or depthwise (VPU)."""
    N, H, W, Cin = x.shape
    k, pad = 3, 1
    Ho = (H + 2 * pad - k) // stride + 1
    Wo = (W + 2 * pad - k) // stride + 1
    xp = jnp.pad(x, ((0, 0), (pad, pad), (pad, pad), (0, 0)))
    cols = [xp[:, dy:dy + stride * Ho:stride, dx:dx + stride * Wo:stride, :]
            for dy in range(k) for dx in range(k)]
    xcol = jnp.stack(cols, axis=3).reshape(N * Ho * Wo, k * k * Cin)
    out = matmul_scale_bias(xcol, wmat, scale, bias, pre_relu=pre_relu)
    return out.reshape(N, Ho, Wo, wmat.shape[1])


def depthwise_conv(x, w, stride, pre_relu=True):
    """'same' depthwise KxK conv as a per-image VPU MAC kernel (no im2col, no
    dense block-diagonal weights).  Stride-2 (reduction cells only) computes
    the cheap stride-1 map and subsamples.  w: (k*k, 1, 1, C) f32."""
    N, H, W, C = x.shape
    k = int(round(w.shape[0] ** 0.5))
    pad = k // 2
    xp = jnp.pad(x, ((0, 0), (pad, pad), (pad, pad), (0, 0)))
    out = pl.pallas_call(
        functools.partial(_dwconv_kernel, k=k, pre_relu=pre_relu),
        out_shape=jax.ShapeDtypeStruct((N, H, W, C), jnp.float32),
        grid_spec=pltpu.PrefetchScalarGridSpec(
            num_scalar_prefetch=0, grid=(N,),
            in_specs=[pl.BlockSpec((1, H + 2 * pad, W + 2 * pad, C),
                                   lambda n: (n, 0, 0, 0)),
                      pl.BlockSpec((k * k, 1, 1, C), lambda n: (0, 0, 0, 0))],
            out_specs=pl.BlockSpec((1, H, W, C), lambda n: (n, 0, 0, 0))),
        compiler_params=_cparams(("parallel",)),
    )(xp, w)
    if stride == 2:
        out = out[:, ::2, ::2, :]
    return out


def pool3x3(x, stride, mode):
    """3x3 max / avg pool, pad 1 (PyTorch semantics: -inf pad for max,
    count_include_pad=False for avg).  Stride 2 subsamples the stride-1 map."""
    N, H, W, C = x.shape
    k, pad = 3, 1
    if mode == 'max':
        xp = jnp.pad(x, ((0, 0), (pad, pad), (pad, pad), (0, 0)),
                     constant_values=-jnp.inf)
        out = pl.pallas_call(
            functools.partial(_maxpool_kernel, k=k),
            out_shape=jax.ShapeDtypeStruct((N, H, W, C), jnp.float32),
            grid_spec=pltpu.PrefetchScalarGridSpec(
                num_scalar_prefetch=0, grid=(N,),
                in_specs=[pl.BlockSpec((1, H + 2 * pad, W + 2 * pad, C),
                                       lambda n: (n, 0, 0, 0))],
                out_specs=pl.BlockSpec((1, H, W, C), lambda n: (n, 0, 0, 0))),
            compiler_params=_cparams(("parallel",)),
        )(xp)
    else:
        xp = jnp.pad(x, ((0, 0), (pad, pad), (pad, pad), (0, 0)))
        # Analytic per-position valid-count map (count_include_pad=False).
        ih = jnp.arange(H)
        iw = jnp.arange(W)
        ch = jnp.minimum(ih + pad, H - 1) - jnp.maximum(ih - pad, 0) + 1
        cw = jnp.minimum(iw + pad, W - 1) - jnp.maximum(iw - pad, 0) + 1
        inv = 1.0 / (ch[:, None] * cw[None, :]).astype(jnp.float32)
        inv = inv.reshape(1, H, W, 1)
        out = pl.pallas_call(
            functools.partial(_avgpool_kernel, k=k),
            out_shape=jax.ShapeDtypeStruct((N, H, W, C), jnp.float32),
            grid_spec=pltpu.PrefetchScalarGridSpec(
                num_scalar_prefetch=0, grid=(N,),
                in_specs=[pl.BlockSpec((1, H + 2 * pad, W + 2 * pad, C),
                                       lambda n: (n, 0, 0, 0)),
                          pl.BlockSpec((1, H, W, 1), lambda n: (0, 0, 0, 0))],
                out_specs=pl.BlockSpec((1, H, W, C), lambda n: (n, 0, 0, 0))),
            compiler_params=_cparams(("parallel",)),
        )(xp, inv)
    if stride == 2:
        out = out[:, ::2, ::2, :]
    return out


def global_avg_pool(x):
    """nn.AvgPool2d(7) on the final 7x7 map == global mean: one reduction
    kernel over (H*W, C) per image -- no 49-tap im2col copy."""
    N, H, W, C = x.shape
    xr = x.reshape(N, H * W, C)
    out = pl.pallas_call(
        _gap_kernel,
        out_shape=jax.ShapeDtypeStruct((N, 1, C), jnp.float32),
        grid_spec=pltpu.PrefetchScalarGridSpec(
            num_scalar_prefetch=0, grid=(N,),
            in_specs=[pl.BlockSpec((1, H * W, C), lambda n: (n, 0, 0))],
            out_specs=pl.BlockSpec((1, 1, C), lambda n: (n, 0, 0))),
        compiler_params=_cparams(("parallel",)),
    )(xr)
    return out.reshape(N, C)


# ----------------------------------------------------------------------------
# Parameter construction (deterministic, PRNGKey-based)
# ----------------------------------------------------------------------------
def _conv_w_mat(key, fan_in, cout):
    w = jax.random.normal(key, (fan_in, cout), jnp.float32) * fan_in ** -0.5
    return w.astype(jnp.bfloat16)   # MXU operands stored bf16 (f32 accumulate)


def _dw_w(key, k, c):
    return jax.random.normal(key, (k * k, 1, 1, c), jnp.float32) / float(k)


def _bn_default(c):
    # PyTorch BatchNorm2d defaults in eval mode: gamma=1, beta=0, mean=0, var=1
    scale = jnp.full((c,), 1.0 / (1.0 + BN_EPS) ** 0.5, jnp.float32)
    bias = jnp.zeros((c,), jnp.float32)
    return scale, bias


def _init_op(key, name, C, stride):
    if name == 'skip_connect':
        if stride == 1:
            return {'type': 'identity'}
        k1, k2 = jax.random.split(key)
        s, b = _bn_default(C)
        return {'type': 'factorized_reduce',
                'w1': _conv_w_mat(k1, C, C // 2),
                'w2': _conv_w_mat(k2, C, C // 2),
                'scale': s, 'bias': b}
    if name == 'max_pool_3x3':
        return {'type': 'max_pool', 'stride': stride}
    if name == 'avg_pool_3x3':
        return {'type': 'avg_pool', 'stride': stride}
    if name == 'sep_conv_3x3':
        ks = jax.random.split(key, 4)
        s1, b1 = _bn_default(C)
        s2, b2 = _bn_default(C)
        return {'type': 'sep_conv', 'stride': stride,
                'dw1': _dw_w(ks[0], 3, C), 'pw1': _conv_w_mat(ks[1], C, C),
                'bn1_s': s1, 'bn1_b': b1,
                'dw2': _dw_w(ks[2], 3, C), 'pw2': _conv_w_mat(ks[3], C, C),
                'bn2_s': s2, 'bn2_b': b2}
    # TODO(synk): remaining DARTS primitives not used by this genotype
    raise NotImplementedError(name)


def _init_cell(key, genotype, genotype_nodes, C_pp, C_p, C, reduction, reduction_prev):
    keys = jax.random.split(key, 4 + 2 * len(genotype_nodes))
    p = {}
    if reduction_prev:   # FactorizedReduce(C_prev_prev, C)
        s, b = _bn_default(C)
        p['pre0'] = {'type': 'factorized_reduce',
                     'w1': _conv_w_mat(keys[0], C_pp, C // 2),
                     'w2': _conv_w_mat(keys[1], C_pp, C // 2),
                     'scale': s, 'bias': b}
    else:                # ReLUConvBN(C_prev_prev, C, 1, 1, 0)
        s, b = _bn_default(C)
        p['pre0'] = {'type': 'relu_conv_bn', 'w': _conv_w_mat(keys[0], C_pp, C),
                     'scale': s, 'bias': b}
    s, b = _bn_default(C)
    p['pre1'] = {'type': 'relu_conv_bn', 'w': _conv_w_mat(keys[2], C_p, C),
                 'scale': s, 'bias': b}
    ops = []
    offset = 0
    kidx = 3
    for i in range(len(genotype_nodes)):
        for j in genotype_nodes[i]:
            stride = 2 if (reduction and j < 2) else 1
            ops.append(_init_op(keys[kidx], PRIMITIVES[genotype[j + offset]], C, stride))
            kidx += 1
        if i == 0:
            offset = 2
        elif i == 1:
            offset = 5
        elif i == 2:
            offset = 9
    p['ops'] = ops
    p['nodes'] = list(genotype_nodes)
    return p


def init_network(key, C, num_classes, layers, genotype, genotype_nodes,
                 steps=4, multiplier=4):
    keys = jax.random.split(key, layers + 5)
    params = {}
    s1_, b1_ = _bn_default(C // 2)
    s2_, b2_ = _bn_default(C)
    params['stem0'] = {'w1': _conv_w_mat(keys[0], 9 * 3, C // 2), 's1': s1_, 'b1': b1_,
                       'w2': _conv_w_mat(keys[1], 9 * (C // 2), C), 's2': s2_, 'b2': b2_}
    s3_, b3_ = _bn_default(C)
    params['stem1'] = {'w': _conv_w_mat(keys[2], 9 * C, C), 's': s3_, 'b': b3_}
    C_pp, C_p, C_curr = C, C, C
    reduction_prev = True
    cells = []
    for i in range(layers):
        if i in [layers // 3, 2 * layers // 3]:
            C_curr *= 2
            reduction = True
        else:
            reduction = False
        sub_g = genotype[i * 14:(i + 1) * 14]
        sub_n = genotype_nodes[i * 4:(i + 1) * 4]
        cells.append(_init_cell(keys[3 + i], sub_g, sub_n, C_pp, C_p, C_curr,
                                reduction, reduction_prev))
        reduction_prev = reduction
        C_pp, C_p = C_p, multiplier * C_curr
    params['cells'] = cells
    kw_, kb_ = jax.random.split(keys[3 + layers])
    params['classifier'] = {
        'w': (jax.random.normal(kw_, (C_p, num_classes), jnp.float32)
              * C_p ** -0.5).astype(jnp.bfloat16),
        'b': jax.random.normal(kb_, (num_classes,), jnp.float32) * 0.01}
    return params


# ----------------------------------------------------------------------------
# Forward pass (functional mirror of NetworkImageNet.forward, eval mode)
# ----------------------------------------------------------------------------
def _factorized_reduce(p, x):
    half = p['w1'].shape[1]
    y1 = conv1x1_bn(x[:, ::2, ::2, :], p['w1'],
                    p['scale'][:half], p['bias'][:half], pre_relu=True)
    y2 = conv1x1_bn(x[:, 1::2, 1::2, :], p['w2'],
                    p['scale'][half:], p['bias'][half:], pre_relu=True)
    # TODO(synk): could fuse both halves into one matmul writing lane offsets
    return jnp.concatenate([y1, y2], axis=-1)


def _sep_conv(p, x, add=None):
    x = depthwise_conv(x, p['dw1'], p['stride'], pre_relu=True)
    x = conv1x1_bn(x, p['pw1'], p['bn1_s'], p['bn1_b'])
    x = depthwise_conv(x, p['dw2'], 1, pre_relu=True)
    x = conv1x1_bn(x, p['pw2'], p['bn2_s'], p['bn2_b'], add=add)
    return x


def _apply_op(p, x, add=None):
    t = p['type']
    if t == 'sep_conv':
        return _sep_conv(p, x, add=add)
    if t == 'identity':
        y = x
    elif t == 'factorized_reduce':
        y = _factorized_reduce(p, x)
    elif t == 'max_pool':
        y = pool3x3(x, p['stride'], 'max')
    elif t == 'avg_pool':
        y = pool3x3(x, p['stride'], 'avg')
    else:
        raise NotImplementedError(t)
    return y if add is None else y + add


def _apply_preprocess(p, x):
    if p['type'] == 'factorized_reduce':
        return _factorized_reduce(p, x)
    return conv1x1_bn(x, p['w'], p['scale'], p['bias'], pre_relu=True)


def _cell_forward(p, s0, s1):
    s0 = _apply_preprocess(p['pre0'], s0)
    s1 = _apply_preprocess(p['pre1'], s1)
    states = [s0, s1]
    for j, (i0, i1) in enumerate(p['nodes']):
        p1, p2 = p['ops'][2 * j], p['ops'][2 * j + 1]
        x1, x2 = states[i0], states[i1]
        # Fuse the node's residual add into the final pointwise matmul of a
        # sep_conv branch when possible (saves one full-map HBM round trip).
        if p1['type'] == 'sep_conv':
            states.append(_apply_op(p1, x1, add=_apply_op(p2, x2)))
        elif p2['type'] == 'sep_conv':
            states.append(_apply_op(p2, x2, add=_apply_op(p1, x1)))
        else:
            states.append(_apply_op(p1, x1) + _apply_op(p2, x2))
    steps = len(p['nodes'])
    # TODO(synk): the concat could be fused by writing each node output
    #             directly into its lane offset of the cell output slab.
    return jnp.concatenate([states[i + 2] for i in range(steps)], axis=-1)


def network_forward(params, x_nchw):
    x = jnp.transpose(x_nchw, (0, 2, 3, 1)).astype(jnp.float32)    # NCHW -> NHWC
    p = params['stem0']
    s0 = conv3x3_bn(x, p['w1'], p['s1'], p['b1'], stride=2)                    # conv+BN
    s0 = conv3x3_bn(s0, p['w2'], p['s2'], p['b2'], stride=2, pre_relu=True)    # ReLU,conv,BN
    p = params['stem1']
    s1 = conv3x3_bn(s0, p['w'], p['s'], p['b'], stride=2, pre_relu=True)       # ReLU,conv,BN
    for cell_p in params['cells']:
        s0, s1 = s1, _cell_forward(cell_p, s0, s1)
    # nn.AvgPool2d(7): the module is built for inputs whose final map is 7x7.
    assert s1.shape[1] == 7 and s1.shape[2] == 7, s1.shape
    feat = global_avg_pool(s1)
    cw = params['classifier']['w']
    logits = matmul_scale_bias(feat, cw, jnp.ones((cw.shape[1],), jnp.float32),
                               params['classifier']['b'])
    return logits, None   # eval mode: logits_aux is None


# ----------------------------------------------------------------------------
if __name__ == "__main__":
    C, num_classes, layers = 8, 10, 1
    # layers=1 -> a single reduction cell (i == layers//3 == 0).
    # 14-entry genotype per cell (only the referenced slots matter) using
    # sep_conv_3x3 / max_pool_3x3 / avg_pool_3x3 / skip_connect primitives,
    # plus 4 node-input pairs per cell.
    genotype = [4, 1, 3, 0, 2, 0, 4, 0, 3, 0, 0, 2, 0, 1]
    genotype_nodes = [(0, 1), (0, 2), (1, 3), (2, 4)]

    key = jax.random.PRNGKey(0)
    pkey, xkey = jax.random.split(key)
    params = init_network(pkey, C, num_classes, layers, genotype, genotype_nodes)

    # NCHW input like the PyTorch module; 112x112 so the final feature map is
    # 7x7 entering nn.AvgPool2d(7) (stem /8, one reduction cell /2).
    x = jax.random.normal(xkey, (2, 3, 112, 112), jnp.float32)

    logits, logits_aux = network_forward(params, x)
    logits = jax.block_until_ready(logits)

    assert logits.shape == (2, num_classes), logits.shape
    assert logits_aux is None
    assert bool(jnp.all(jnp.isfinite(logits)))
    print("KERNEL_OK")
</pallas_src>

<mosaic_0001>
module attributes {stable_mosaic.version = 11 : i64} {
  func.func @_matmul_kernel(%arg0: i32, %arg1: i32, %arg2: memref<256x27xf32, #tpu.memory_space<vmem>>, %arg3: memref<27x4xbf16, #tpu.memory_space<vmem>>, %arg4: memref<1x4xf32, #tpu.memory_space<vmem>>, %arg5: memref<1x4xf32, #tpu.memory_space<vmem>>, %arg6: memref<256x4xf32, #tpu.memory_space<vmem>>) attributes {dimension_semantics = [#tpu.dimension_semantics<parallel>, #tpu.dimension_semantics<parallel>], iteration_bounds = array<i64: 25, 1>, scalar_prefetch = 0 : i64, scratch_operands = 0 : i64, tpu.core_type = #tpu.core_type<tc>, window_params = [{transform_indices = @transform_0, window_bounds = array<i64: 256, 27>}, {transform_indices = @transform_1, window_bounds = array<i64: 27, 4>}, {transform_indices = @transform_2, window_bounds = array<i64: 1, 4>}, {transform_indices = @transform_3, window_bounds = array<i64: 1, 4>}, {transform_indices = @transform_4, window_bounds = array<i64: 256, 4>}]} {
    %c0 = arith.constant 0 : index
    %c0_0 = arith.constant 0 : index
    %0 = vector.load %arg2[%c0, %c0_0] : memref<256x27xf32, #tpu.memory_space<vmem>>, vector<256x27xf32>
    %1 = arith.truncf %0 : vector<256x27xf32> to vector<256x27xbf16>
    %c0_1 = arith.constant 0 : index
    %c0_2 = arith.constant 0 : index
    %2 = vector.load %arg3[%c0_1, %c0_2] : memref<27x4xbf16, #tpu.memory_space<vmem>>, vector<27x4xbf16>
    %cst = arith.constant dense<0.000000e+00> : vector<256x4xf32>
    %3 = tpu.matmul %1, %2, %cst {dimension_numbers = #tpu.dot_dimension_numbers<[1], [0], [0], [1], [0, 0, 1, 1], [], []>} : vector<256x27xbf16>, vector<27x4xbf16>, vector<256x4xf32> -> vector<256x4xf32>
    %c0_3 = arith.constant 0 : index
    %c0_4 = arith.constant 0 : index
    %4 = vector.load %arg4[%c0_3, %c0_4] : memref<1x4xf32, #tpu.memory_space<vmem>>, vector<1x4xf32>
    %5 = vector.broadcast %4 : vector<1x4xf32> to vector<256x4xf32>
    %6 = arith.mulf %3, %5 : vector<256x4xf32>
    %c0_5 = arith.constant 0 : index
    %c0_6 = arith.constant 0 : index
    %7 = vector.load %arg5[%c0_5, %c0_6] : memref<1x4xf32, #tpu.memory_space<vmem>>, vector<1x4xf32>
    %8 = vector.broadcast %7 : vector<1x4xf32> to vector<256x4xf32>
    %9 = arith.addf %6, %8 : vector<256x4xf32>
    %c0_7 = arith.constant 0 : index
    %c0_8 = arith.constant 0 : index
    %10 = vector.load %arg6[%c0_7, %c0_8] : memref<256x4xf32, #tpu.memory_space<vmem>>, vector<256x4xf32>
    tpu.vector_store %arg6[%c0_7, %c0_8], %9 {strides = array<i32>} : memref<256x4xf32, #tpu.memory_space<vmem>>, vector<256x4xf32>,
    return
  }
  func.func @transform_0(%arg0: i32, %arg1: i32) -> (i32, i32) {
    %c0_i32 = arith.constant 0 : i32
    %c0_i32_0 = arith.constant 0 : i32
    return %arg0, %c0_i32 : i32, i32
  }
  func.func @transform_1(%arg0: i32, %arg1: i32) -> (i32, i32) {
    %c0_i32 = arith.constant 0 : i32
    %c0_i32_0 = arith.constant 0 : i32
    return %c0_i32, %arg1 : i32, i32
  }
  func.func @transform_2(%arg0: i32, %arg1: i32) -> (i32, i32) {
    %c0_i32 = arith.constant 0 : i32
    %c0_i32_0 = arith.constant 0 : i32
    return %c0_i32, %arg1 : i32, i32
  }
  func.func @transform_3(%arg0: i32, %arg1: i32) -> (i32, i32) {
    %c0_i32 = arith.constant 0 : i32
    %c0_i32_0 = arith.constant 0 : i32
    return %c0_i32, %arg1 : i32, i32
  }
  func.func @transform_4(%arg0: i32, %arg1: i32) -> (i32, i32) {
    %c0_i32 = arith.constant 0 : i32
    return %arg0, %arg1 : i32, i32
  }
}

</mosaic_0001>

<llo_original>
// kernel: tpu_custom_call.1
$region0: #{tpu_custom_call.1}
  #allocation0 [shape = 'u32[]', space=smem, size = 0x4, offset = 0x4, fixed_abs, tag = 'smem constant byte address 0x4 - core index']
  #allocation1 [shape = 'u32[72,128]{1,0:T(1,128)}', space=vmem, size = 0x9000, scoped, tag = 'internal scratch']
  %s0 = inlined_call_operand.vmem [shape: f32[6272,27], index: 0, kind: input, shape index: {}]
  %s1 = inlined_call_operand.vmem [shape: bf16[27,4], index: 1, kind: input, shape index: {}]
  %s2 = inlined_call_operand.vmem [shape: f32[1,4], index: 2, kind: input, shape index: {}]
  %s3 = inlined_call_operand.vmem [shape: f32[1,4], index: 3, kind: input, shape index: {}]
  %s4 = inlined_call_operand.vmem [shape: f32[6272,4], index: 4, kind: output, shape index: {}]
  %s5 = sld [smem:[#allocation0]]
  $region97: #{tpu_custom_call.1} parent=0
    _
  %s7 = ssub.s32 1, %s5
  %s8 = scalar_select 0, %s7, %s5
  $region1: #{tpu_custom_call.1} parent=0
    #allocation2 [shape = 'u8[262144]{0}', space=vmem, size = 0x40000, scoped, tag = 'output window, operand 0']
    loop: start=0, step=1, limit=27
    $region2: #{tpu_custom_call.1} parent=1 // loop_pre_header
      _
    $region3: #{tpu_custom_call.1} parent=1 // loop_header
      %s10 = sphi 0, %s14
      %p11 = scmp.ge.s32.totalorder %s10, 27
      %s17 = sphi 0, %s29
      %s18 = sphi 0, %s25
      %s19 = sphi 0, %s17
      %s20 = sphi 0, %s18
      %s21 = sphi 0, %s19
      %s22 = sphi 0, %s20
      %s32 = sphi 0, %s34
      %s35 = sphi 0, %s32
      %s36 = sphi 0, %s35
      %s52 = sphi 0, %s36
      %s58 = sphi 0, %s60
      %s61 = sphi 0, %s58
      %s62 = sphi 0, %s61
      %s78 = sphi 0, %s62
      %s84 = sphi 0, %s86
      %s87 = sphi 0, %s84
      %s88 = sphi 0, %s87
      %s104 = sphi 0, %s88
      %s110 = sphi 0, %s112
      %s113 = sphi 0, %s110
      %s114 = sphi 0, %s113
      %s130 = sphi 0, %s114
      %s138 = sphi 0, %s140
      %s141 = sphi 0, %s138
      %s142 = sphi 0, %s141
      %s158 = sphi 0, %s142
    $region4: #{tpu_custom_call.1} parent=1 // loop_header_branch
      %13 = sbr.rel (%p11) target = $region8
    $region5: #{tpu_custom_call.1} parent=1 // loop_body
      %s15 = ssub.s32 %s10, 1
      %s16 = ssub.s32 %s10, 2
      %s23 = sadd.s32 1, %s18
      %p24 = scmp.ge.s32.totalorder %s23, 1
      %s25 = scalar_select %p24, 0, %s23
      %s26 = sadd.s32 1, %s17
      %s27 = scalar_select %p24, %s26, %s17
      %p28 = scmp.ge.s32.totalorder %s27, 25
      %s29 = scalar_select %p28, 0, %s27
      %s30 = ssub.s32 %s17, %s29
      %p31 = scmp.eq.s32.totalorder %s30, 0
      %s33 = sadd.s32 %s32, 1
      %s34 = scalar_select %p31, %s32, %s33
      %p37 = pneg %p31
      %p38 = scmp.eq.s32.totalorder %s10, 24
      %p39 = por %p37, %p38
      %p40 = scmp.ne.s32.totalorder %s32, %s35
      %p41 = scmp.eq.s32.totalorder %s10, 0
      %p42 = por %p40, %p41
      %p43 = scmp.ne.s32.totalorder %s32, %s35
      %p44 = scmp.eq.s32.totalorder %s15, 24
      %p45 = por %p43, %p44
      %p46 = scmp.ne.s32.totalorder %s35, %s36
      %p47 = scmp.eq.s32.totalorder %s15, 0
      %p48 = por %p46, %p47
      %p49 = scmp.ne.s32.totalorder %s35, %s36
      %p50 = scmp.eq.s32.totalorder %s16, 24
      %p51 = por %p49, %p50
      %p53 = scmp.ne.s32.totalorder %s36, %s52
      %p54 = scmp.eq.s32.totalorder %s16, 0
      %p55 = por %p53, %p54
      %s56 = ssub.s32 %s18, %s25
      %p57 = scmp.eq.s32.totalorder %s56, 0
      %s59 = sadd.s32 %s58, 1
      %s60 = scalar_select %p57, %s58, %s59
      %p63 = pneg %p57
      %p64 = scmp.eq.s32.totalorder %s10, 24
      %p65 = por %p63, %p64
      %p66 = scmp.ne.s32.totalorder %s58, %s61
      %p67 = scmp.eq.s32.totalorder %s10, 0
      %p68 = por %p66, %p67
      %p69 = scmp.ne.s32.totalorder %s58, %s61
      %p70 = scmp.eq.s32.totalorder %s15, 24
      %p71 = por %p69, %p70
      %p72 = scmp.ne.s32.totalorder %s61, %s62
      %p73 = scmp.eq.s32.totalorder %s15, 0
      %p74 = por %p72, %p73
      %p75 = scmp.ne.s32.totalorder %s61, %s62
      %p76 = scmp.eq.s32.totalorder %s16, 24
      %p77 = por %p75, %p76
      %p79 = scmp.ne.s32.totalorder %s62, %s78
      %p80 = scmp.eq.s32.totalorder %s16, 0
      %p81 = por %p79, %p80
      %s82 = ssub.s32 %s18, %s25
      %p83 = scmp.eq.s32.totalorder %s82, 0
      %s85 = sadd.s32 %s84, 1
      %s86 = scalar_select %p83, %s84, %s85
      %p89 = pneg %p83
      %p90 = scmp.eq.s32.totalorder %s10, 24
      %p91 = por %p89, %p90
      %p92 = scmp.ne.s32.totalorder %s84, %s87
      %p93 = scmp.eq.s32.totalorder %s10, 0
      %p94 = por %p92, %p93
      %p95 = scmp.ne.s32.totalorder %s84, %s87
      %p96 = scmp.eq.s32.totalorder %s15, 24
      %p97 = por %p95, %p96
      %p98 = scmp.ne.s32.totalorder %s87, %s88
      %p99 = scmp.eq.s32.totalorder %s15, 0
      %p100 = por %p98, %p99
      %p101 = scmp.ne.s32.totalorder %s87, %s88
      %p102 = scmp.eq.s32.totalorder %s16, 24
      %p103 = por %p101, %p102
      %p105 = scmp.ne.s32.totalorder %s88, %s104
      %p106 = scmp.eq.s32.totalorder %s16, 0
      %p107 = por %p105, %p106
      %s108 = ssub.s32 %s18, %s25
      %p109 = scmp.eq.s32.totalorder %s108, 0
      %s111 = sadd.s32 %s110, 1
      %s112 = scalar_select %p109, %s110, %s111
      %p115 = pneg %p109
      %p116 = scmp.eq.s32.totalorder %s10, 24
      %p117 = por %p115, %p116
      %p118 = scmp.ne.s32.totalorder %s110, %s113
      %p119 = scmp.eq.s32.totalorder %s10, 0
      %p120 = por %p118, %p119
      %p121 = scmp.ne.s32.totalorder %s110, %s113
      %p122 = scmp.eq.s32.totalorder %s15, 24
      %p123 = por %p121, %p122
      %p124 = scmp.ne.s32.totalorder %s113, %s114
      %p125 = scmp.eq.s32.totalorder %s15, 0
      %p126 = por %p124, %p125
      %p127 = scmp.ne.s32.totalorder %s113, %s114
      %p128 = scmp.eq.s32.totalorder %s16, 24
      %p129 = por %p127, %p128
      %p131 = scmp.ne.s32.totalorder %s114, %s130
      %p132 = scmp.eq.s32.totalorder %s16, 0
      %p133 = por %p131, %p132
      %s134 = ssub.s32 %s17, %s29
      %s135 = ssub.s32 %s18, %s25
      %s136 = sor.u32 %s134, %s135
      %p137 = scmp.eq.s32.totalorder %s136, 0
      %s139 = sadd.s32 %s138, 1
      %s140 = scalar_select %p137, %s138, %s139
      %p143 = pneg %p137
      %p144 = scmp.eq.s32.totalorder %s10, 24
      %p145 = por %p143, %p144
      %p146 = scmp.ne.s32.totalorder %s138, %s141
      %p147 = scmp.eq.s32.totalorder %s10, 0
      %p148 = por %p146, %p147
      %p149 = scmp.ne.s32.totalorder %s138, %s141
      %p150 = scmp.eq.s32.totalorder %s15, 24
      %p151 = por %p149, %p150
      %p152 = scmp.ne.s32.totalorder %s141, %s142
      %p153 = scmp.eq.s32.totalorder %s15, 0
      %p154 = por %p152, %p153
      %p155 = scmp.ne.s32.totalorder %s141, %s142
      %p156 = scmp.eq.s32.totalorder %s16, 24
      %p157 = por %p155, %p156
      %p159 = scmp.ne.s32.totalorder %s142, %s158
      %p160 = scmp.eq.s32.totalorder %s16, 0
      %p161 = por %p159, %p160
      %p162 = scmp.le.s32.totalorder 1, %s10
      %p163 = scmp.lt.s32.totalorder %s10, 26
      %p164 = pnand %p162, %p163
      %p165 = pneg %p164
      // Predicated region
      $region9: #{tpu_custom_call.1} parent=5 // pred_check
        _
      $region10: #{tpu_custom_call.1} parent=5 // pred_check_branch
        %167 = sbr.rel (%p164) target = $region12
      $region11: #{tpu_custom_call.1} parent=5 // pred_region
        %s168 = ssub.s32 %s10, 1
        // Predicated region
        $region13: #{tpu_custom_call.1} parent=11 // pred_check
          %p169 = pneg %p74
        $region14: #{tpu_custom_call.1} parent=11 // pred_check_branch
          %171 = sbr.rel (%p169) target = $region16
        $region15: #{tpu_custom_call.1} parent=11 // pred_region
          %p172 = scmp.lt.s32.totalorder %s20, 0
          %s173 = scalar_select %p172, %s20, 0
          %s174 = smul.addr %s173, 4
          %s175 = scalar_lea.vmem %s1, %s174
        $region16: #{tpu_custom_call.1} parent=11 // pred_fallthru
          _
        // Predicated region
        $region17: #{tpu_custom_call.1} parent=11 // pred_check
          %p176 = pneg %p100
        $region18: #{tpu_custom_call.1} parent=11 // pred_check_branch
          %178 = sbr.rel (%p176) target = $region20
        $region19: #{tpu_custom_call.1} parent=11 // pred_region
          %p179 = scmp.lt.s32.totalorder %s20, 0
          %s180 = scalar_select %p179, %s20, 0
          %s181 = scalar_lea.vmem %s2, %s180
        $region20: #{tpu_custom_call.1} parent=11 // pred_fallthru
          _
        // Predicated region
        $region21: #{tpu_custom_call.1} parent=11 // pred_check
          %p182 = pneg %p126
        $region22: #{tpu_custom_call.1} parent=11 // pred_check_branch
          %184 = sbr.rel (%p182) target = $region24
        $region23: #{tpu_custom_call.1} parent=11 // pred_region
          %p185 = scmp.lt.s32.totalorder %s20, 0
          %s186 = scalar_select %p185, %s20, 0
          %s187 = scalar_lea.vmem %s3, %s186
        $region24: #{tpu_custom_call.1} parent=11 // pred_fallthru
          _
      $region12: #{tpu_custom_call.1} parent=5 // pred_fallthru
        _
      %p188 = scmp.lt.s32.totalorder %s10, 25
      // Predicated region
      $region25: #{tpu_custom_call.1} parent=5 // pred_check
        %p189 = pneg %p188
      $region26: #{tpu_custom_call.1} parent=5 // pred_check_branch
        %191 = sbr.rel (%p189) target = $region28
      $region27: #{tpu_custom_call.1} parent=5 // pred_region
        // Predicated region
        $region29: #{tpu_custom_call.1} parent=27 // pred_check
          %p192 = pneg %p42
        $region30: #{tpu_custom_call.1} parent=27 // pred_check_branch
          %194 = sbr.rel (%p192) target = $region32
        $region31: #{tpu_custom_call.1} parent=27 // pred_region
          %s195 = smul.u32 32, %s17
          %s196 = ssub.s32 784, %s195
          %p197 = scmp.lt.s32.totalorder %s196, 32
          %s198 = scalar_select %p197, %s196, 32
          %s199 = smul.u32 8, %s198
          %p200 = scmp.lt.s32.totalorder %s195, 783
          %s201 = scalar_select %p200, %s195, 783
          %s202 = smul.addr %s201, 8
          %s203 = scalar_lea.vmem %s0, %s202
          %s204 = smul.u32 32, %s17
          %s205 = ssub.s32 784, %s204
          %p206 = scmp.lt.s32.totalorder %s205, 32
          %s207 = scalar_select %p206, %s205, 32
          %s208 = smul.u32 8, %s207
        $region32: #{tpu_custom_call.1} parent=27 // pred_fallthru
          _
      $region28: #{tpu_custom_call.1} parent=5 // pred_fallthru
        _
      %p209 = scmp.le.s32.totalorder 1, %s10
      %p210 = scmp.lt.s32.totalorder %s10, 26
      %p211 = pnand %p209, %p210
      %p212 = pneg %p211
      // Predicated region
      $region33: #{tpu_custom_call.1} parent=5 // pred_check
        _
      $region34: #{tpu_custom_call.1} parent=5 // pred_check_branch
        %214 = sbr.rel (%p211) target = $region36
      $region35: #{tpu_custom_call.1} parent=5 // pred_region
        %s215 = ssub.s32 %s10, 1
        %s216 = smul.u32 32, %s19
        %s217 = ssub.s32 784, %s216
        %p218 = scmp.lt.s32.totalorder %s217, 32
        %s219 = scalar_select %p218, %s217, 32
        %s220 = smul.u32 8, %s219
        %p221 = scmp.lt.s32.totalorder %s216, 783
        %s222 = scalar_select %p221, %s216, 783
        %s223 = smul.addr %s222, 8
        %s224 = scalar_lea.vmem %s0, %s223
        %p225 = pneg %p48
        %p226 = pneg %p45
        %p227 = scmp.lt.s32.totalorder %s20, 0
        %s228 = scalar_select %p227, %s20, 0
        %s229 = smul.addr %s228, 4
        %s230 = scalar_lea.vmem %s1, %s229
        %p231 = pneg %p74
        %p232 = pneg %p71
        %p233 = scmp.lt.s32.totalorder %s20, 0
        %s234 = scalar_select %p233, %s20, 0
        %s235 = scalar_lea.vmem %s2, %s234
        %p236 = pneg %p100
        %p237 = pneg %p97
        %p238 = scmp.lt.s32.totalorder %s20, 0
        %s239 = scalar_select %p238, %s20, 0
        %s240 = scalar_lea.vmem %s3, %s239
        %p241 = pneg %p126
        %p242 = pneg %p123
        %p243 = pneg %p154
        %p244 = pneg %p151
        %s245 = sand.u32 %s141, 1
        %s246 = sand.u32 %s141, 1
        %s247 = smul.addr %s246, 256
        %s248 = scalar_lea.vmem [#allocation2], %s247
        %s249 = smul.u32 32, %s19
        %s250 = ssub.s32 784, %s249
        %p251 = scmp.lt.s32.totalorder %s250, 32
        %s252 = scalar_select %p251, %s250, 32
        %s253 = smul.u32 8, %s252
        %p254 = scmp.lt.s32.totalorder %s249, 783
        %s255 = scalar_select %p254, %s249, 783
        %s256 = smul.addr %s255, 8
        %s257 = scalar_lea.vmem %s0, %s256
        %s258 = smul.u32 32, %s19
        %s259 = ssub.s32 784, %s258
        %p260 = scmp.lt.s32.totalorder %s259, 32
        %s261 = scalar_select %p260, %s259, 32
        %s262 = smul.u32 8, %s261
        %p263 = scmp.lt.s32.totalorder %s20, 0
        %s264 = scalar_select %p263, %s20, 0
        %s265 = smul.addr %s264, 4
        %s266 = scalar_lea.vmem %s1, %s265
        %p267 = scmp.lt.s32.totalorder %s20, 0
        %s268 = scalar_select %p267, %s20, 0
        %s269 = scalar_lea.vmem %s2, %s268
        %p270 = scmp.lt.s32.totalorder %s20, 0
        %s271 = scalar_select %p270, %s20, 0
        %s272 = scalar_lea.vmem %s3, %s271
        %s273 = smul.u32 32, %s19
        %s274 = ssub.s32 784, %s273
        %p275 = scmp.lt.s32.totalorder %s274, 32
        %s276 = scalar_select %p275, %s274, 32
        %s277 = smul.u32 8, %s276
        %v279 = vld [vmem:[%s257] sm:$0xff]
        %v280 = vld [vmem:[%s257 + $0x8] sm:$0xff]
        %v281 = vld [vmem:[%s257 + $0x10] sm:$0xff]
        %v282 = vld [vmem:[%s257 + $0x18] sm:$0xff]
        %v283 = vld [vmem:[%s257 + $0x20] sm:$0xff]
        %v284 = vld [vmem:[%s257 + $0x28] sm:$0xff]
        %v285 = vld [vmem:[%s257 + $0x30] sm:$0xff]
        %v286 = vld [vmem:[%s257 + $0x38] sm:$0xff]
        %v287 = vld [vmem:[%s257 + $0x40] sm:$0xff]
        %v288 = vld [vmem:[%s257 + $0x48] sm:$0xff]
        %v289 = vld [vmem:[%s257 + $0x50] sm:$0xff]
        %v290 = vld [vmem:[%s257 + $0x58] sm:$0xff]
        %v291 = vld [vmem:[%s257 + $0x60] sm:$0xff]
        %v292 = vld [vmem:[%s257 + $0x68] sm:$0xff]
        %v293 = vld [vmem:[%s257 + $0x70] sm:$0xff]
        %v294 = vld [vmem:[%s257 + $0x78] sm:$0xff]
        %v295 = vld [vmem:[%s257 + $0x80] sm:$0xff]
        %v296 = vld [vmem:[%s257 + $0x88] sm:$0xff]
        %v297 = vld [vmem:[%s257 + $0x90] sm:$0xff]
        %v298 = vld [vmem:[%s257 + $0x98] sm:$0xff]
        %v299 = vld [vmem:[%s257 + $0xa0] sm:$0xff]
        %v300 = vld [vmem:[%s257 + $0xa8] sm:$0xff]
        %v301 = vld [vmem:[%s257 + $0xb0] sm:$0xff]
        %v302 = vld [vmem:[%s257 + $0xb8] sm:$0xff]
        %v303 = vld [vmem:[%s257 + $0xc0] sm:$0xff]
        %v304 = vld [vmem:[%s257 + $0xc8] sm:$0xff]
        %v305 = vld [vmem:[%s257 + $0xd0] sm:$0xff]
        %v306 = vld [vmem:[%s257 + $0xd8] sm:$0xff]
        %v307 = vld [vmem:[%s257 + $0xe0] sm:$0xff]
        %v308 = vld [vmem:[%s257 + $0xe8] sm:$0xff]
        %v309 = vld [vmem:[%s257 + $0xf0] sm:$0xff]
        %v310 = vld [vmem:[%s257 + $0xf8] sm:$0xff]
        %v311 = vpack.c.bf16 %v280, %v279
        %v312 = vpack.c.bf16 %v282, %v281
        %v313 = vpack.c.bf16 %v284, %v283
        %v314 = vpack.c.bf16 %v286, %v285
        %v315 = vpack.c.bf16 %v288, %v287
        %v316 = vpack.c.bf16 %v290, %v289
        %v317 = vpack.c.bf16 %v292, %v291
        %v318 = vpack.c.bf16 %v294, %v293
        %v319 = vpack.c.bf16 %v296, %v295
        %v320 = vpack.c.bf16 %v298, %v297
        %v321 = vpack.c.bf16 %v300, %v299
        %v322 = vpack.c.bf16 %v302, %v301
        %v323 = vpack.c.bf16 %v304, %v303
        %v324 = vpack.c.bf16 %v306, %v305
        %v325 = vpack.c.bf16 %v308, %v307
        %v326 = vpack.c.bf16 %v310, %v309
        %v327 = vld [vmem:[%s266] sm:$0xf]
        %v328 = vld [vmem:[%s266 + $0x4] sm:$0xf]
        %v329 = vld [vmem:[%s266 + $0x8] sm:$0xf]
        %v330 = vld [vmem:[%s266 + $0xc] sm:$0x3]
        %v335 = vunpack.c.l.b16 %v327
        %v336 = vunpack.c.l.b16 %v328
        %v337 = vunpack.c.l.b16 %v329
        %v338 = vunpack.c.l.b16 %v330
        %v339 = vpack.c.b16 %v336, %v335
        %v340 = vpack.c.b16 %v338, %v337
        %vm342 = vcmask 220160
        %v344 = vsel %vm342, %v311, 0
        %v347 = vsel %vm342, %v312, 0
        %v350 = vsel %vm342, %v313, 0
        %v353 = vsel %vm342, %v314, 0
        %v356 = vsel %vm342, %v315, 0
        %v359 = vsel %vm342, %v316, 0
        %v362 = vsel %vm342, %v317, 0
        %v365 = vsel %vm342, %v318, 0
        %v368 = vsel %vm342, %v319, 0
        %v371 = vsel %vm342, %v320, 0
        %v374 = vsel %vm342, %v321, 0
        %v377 = vsel %vm342, %v322, 0
        %v380 = vsel %vm342, %v323, 0
        %v383 = vsel %vm342, %v324, 0
        %v386 = vsel %vm342, %v325, 0
        %v389 = vsel %vm342, %v326, 0
        %vm391 = vcmask 1044480
        %vm392 = vcmask 1045504
        %v393 = vsel %vm391, 4294967295, 65535
        %v394 = vsel %vm392, %v393, 0
        %v396 = vand.u32 %v340, %v394
        %398 = vmatpush.bf16.msra.mxu0 0
        %399 = vmatpush.bf16.msra.mxu0 0
        %400 = vmatpush.bf16.msra.mxu0 0
        %401 = vmatpush.bf16.msra.mxu0 0
        %402 = vmatpush.bf16.msra.mxu0 0
        %403 = vmatpush.bf16.msra.mxu0 0
        %404 = vmatpush.bf16.msra.mxu0 %v396
        %405 = vmatpush.bf16.msra.mxu0 %v339
        %406 = vmatmul.bf16.gmra.mxu0 %v344
        %v407 = vpop.f32.mrf.mxu0
        %v408 = vadd.f32 0.0, %v407
        %v409 = vpop.f32.mrf.mxu0
        %v410 = vadd.f32 0.0, %v409
        %411 = vmatmul.bf16.gmra.mxu0 %v347
        %v412 = vpop.f32.mrf.mxu0
        %v413 = vadd.f32 0.0, %v412
        %v414 = vpop.f32.mrf.mxu0
        %v415 = vadd.f32 0.0, %v414
        %416 = vmatmul.bf16.gmra.mxu0 %v350
        %v417 = vpop.f32.mrf.mxu0
        %v418 = vadd.f32 0.0, %v417
        %v419 = vpop.f32.mrf.mxu0
        %v420 = vadd.f32 0.0, %v419
        %421 = vmatmul.bf16.gmra.mxu0 %v353
        %v422 = vpop.f32.mrf.mxu0
        %v423 = vadd.f32 0.0, %v422
        %v424 = vpop.f32.mrf.mxu0
        %v425 = vadd.f32 0.0, %v424
        %426 = vmatmul.bf16.gmra.mxu0 %v356
        %v427 = vpop.f32.mrf.mxu0
        %v428 = vadd.f32 0.0, %v427
        %v429 = vpop.f32.mrf.mxu0
        %v430 = vadd.f32 0.0, %v429
        %431 = vmatmul.bf16.gmra.mxu0 %v359
        %v432 = vpop.f32.mrf.mxu0
        %v433 = vadd.f32 0.0, %v432
        %v434 = vpop.f32.mrf.mxu0
        %v435 = vadd.f32 0.0, %v434
        %436 = vmatmul.bf16.gmra.mxu0 %v362
        %v437 = vpop.f32.mrf.mxu0
        %v438 = vadd.f32 0.0, %v437
        %v439 = vpop.f32.mrf.mxu0
        %v440 = vadd.f32 0.0, %v439
        %441 = vmatmul.bf16.gmra.mxu0 %v365
        %v442 = vpop.f32.mrf.mxu0
        %v443 = vadd.f32 0.0, %v442
        %v444 = vpop.f32.mrf.mxu0
        %v445 = vadd.f32 0.0, %v444
        %446 = vmatmul.bf16.gmra.mxu0 %v368
        %v447 = vpop.f32.mrf.mxu0
        %v448 = vadd.f32 0.0, %v447
        %v449 = vpop.f32.mrf.mxu0
        %v450 = vadd.f32 0.0, %v449
        %451 = vmatmul.bf16.gmra.mxu0 %v371
        %v452 = vpop.f32.mrf.mxu0
        %v453 = vadd.f32 0.0, %v452
        %v454 = vpop.f32.mrf.mxu0
        %v455 = vadd.f32 0.0, %v454
        %456 = vmatmul.bf16.gmra.mxu0 %v374
        %v457 = vpop.f32.mrf.mxu0
        %v458 = vadd.f32 0.0, %v457
        %v459 = vpop.f32.mrf.mxu0
        %v460 = vadd.f32 0.0, %v459
        %461 = vmatmul.bf16.gmra.mxu0 %v377
        %v462 = vpop.f32.mrf.mxu0
        %v463 = vadd.f32 0.0, %v462
        %v464 = vpop.f32.mrf.mxu0
        %v465 = vadd.f32 0.0, %v464
        %466 = vmatmul.bf16.gmra.mxu0 %v380
        %v467 = vpop.f32.mrf.mxu0
        %v468 = vadd.f32 0.0, %v467
        %v469 = vpop.f32.mrf.mxu0
        %v470 = vadd.f32 0.0, %v469
        %471 = vmatmul.bf16.gmra.mxu0 %v383
        %v472 = vpop.f32.mrf.mxu0
        %v473 = vadd.f32 0.0, %v472
        %v474 = vpop.f32.mrf.mxu0
        %v475 = vadd.f32 0.0, %v474
        %476 = vmatmul.bf16.gmra.mxu0 %v386
        %v477 = vpop.f32.mrf.mxu0
        %v478 = vadd.f32 0.0, %v477
        %v479 = vpop.f32.mrf.mxu0
        %v480 = vadd.f32 0.0, %v479
        %481 = vmatmul.bf16.gmra.mxu0 %v389
        %v482 = vpop.f32.mrf.mxu0
        %v483 = vadd.f32 0.0, %v482
        %v484 = vpop.f32.mrf.mxu0
        %v485 = vadd.f32 0.0, %v484
        %486 = vdwg.mxu0
        %v487 = vld [vmem:[%s269] sm:$0x1]
        %v489 = vperm.slane %v487, 0
        %v491 = vmul.f32 %v408, %v489
        %v492 = vmul.f32 %v410, %v489
        %v493 = vmul.f32 %v413, %v489
        %v494 = vmul.f32 %v415, %v489
        %v495 = vmul.f32 %v418, %v489
        %v496 = vmul.f32 %v420, %v489
        %v497 = vmul.f32 %v423, %v489
        %v498 = vmul.f32 %v425, %v489
        %v499 = vmul.f32 %v428, %v489
        %v500 = vmul.f32 %v430, %v489
        %v501 = vmul.f32 %v433, %v489
        %v502 = vmul.f32 %v435, %v489
        %v503 = vmul.f32 %v438, %v489
        %v504 = vmul.f32 %v440, %v489
        %v505 = vmul.f32 %v443, %v489
        %v506 = vmul.f32 %v445, %v489
        %v507 = vmul.f32 %v448, %v489
        %v508 = vmul.f32 %v450, %v489
        %v509 = vmul.f32 %v453, %v489
        %v510 = vmul.f32 %v455, %v489
        %v511 = vmul.f32 %v458, %v489
        %v512 = vmul.f32 %v460, %v489
        %v513 = vmul.f32 %v463, %v489
        %v514 = vmul.f32 %v465, %v489
        %v515 = vmul.f32 %v468, %v489
        %v516 = vmul.f32 %v470, %v489
        %v517 = vmul.f32 %v473, %v489
        %v518 = vmul.f32 %v475, %v489
        %v519 = vmul.f32 %v478, %v489
        %v520 = vmul.f32 %v480, %v489
        %v521 = vmul.f32 %v483, %v489
        %v522 = vmul.f32 %v485, %v489
        %v523 = vld [vmem:[%s272] sm:$0x1]
        %v525 = vperm.slane %v523, 0
        %v527 = vadd.f32 %v491, %v525
        %v528 = vadd.f32 %v492, %v525
        %v529 = vadd.f32 %v493, %v525
        %v530 = vadd.f32 %v494, %v525
        %v531 = vadd.f32 %v495, %v525
        %v532 = vadd.f32 %v496, %v525
        %v533 = vadd.f32 %v497, %v525
        %v534 = vadd.f32 %v498, %v525
        %v535 = vadd.f32 %v499, %v525
        %v536 = vadd.f32 %v500, %v525
        %v537 = vadd.f32 %v501, %v525
        %v538 = vadd.f32 %v502, %v525
        %v539 = vadd.f32 %v503, %v525
        %v540 = vadd.f32 %v504, %v525
        %v541 = vadd.f32 %v505, %v525
        %v542 = vadd.f32 %v506, %v525
        %v543 = vadd.f32 %v507, %v525
        %v544 = vadd.f32 %v508, %v525
        %v545 = vadd.f32 %v509, %v525
        %v546 = vadd.f32 %v510, %v525
        %v547 = vadd.f32 %v511, %v525
        %v548 = vadd.f32 %v512, %v525
        %v549 = vadd.f32 %v513, %v525
        %v550 = vadd.f32 %v514, %v525
        %v551 = vadd.f32 %v515, %v525
        %v552 = vadd.f32 %v516, %v525
        %v553 = vadd.f32 %v517, %v525
        %v554 = vadd.f32 %v518, %v525
        %v555 = vadd.f32 %v519, %v525
        %v556 = vadd.f32 %v520, %v525
        %v557 = vadd.f32 %v521, %v525
        %v558 = vadd.f32 %v522, %v525
        %vm559 = vcmask 31744
        %560 = vst.msk [vmem:[%s248] sm:$0xff] %vm559, %v527
        %561 = vst.msk [vmem:[%s248 + $0x8] sm:$0xff] %vm559, %v528
        %562 = vst.msk [vmem:[%s248 + $0x10] sm:$0xff] %vm559, %v529
        %563 = vst.msk [vmem:[%s248 + $0x18] sm:$0xff] %vm559, %v530
        %564 = vst.msk [vmem:[%s248 + $0x20] sm:$0xff] %vm559, %v531
        %565 = vst.msk [vmem:[%s248 + $0x28] sm:$0xff] %vm559, %v532
        %566 = vst.msk [vmem:[%s248 + $0x30] sm:$0xff] %vm559, %v533
        %567 = vst.msk [vmem:[%s248 + $0x38] sm:$0xff] %vm559, %v534
        %568 = vst.msk [vmem:[%s248 + $0x40] sm:$0xff] %vm559, %v535
        %569 = vst.msk [vmem:[%s248 + $0x48] sm:$0xff] %vm559, %v536
        %570 = vst.msk [vmem:[%s248 + $0x50] sm:$0xff] %vm559, %v537
        %571 = vst.msk [vmem:[%s248 + $0x58] sm:$0xff] %vm559, %v538
        %572 = vst.msk [vmem:[%s248 + $0x60] sm:$0xff] %vm559, %v539
        %573 = vst.msk [vmem:[%s248 + $0x68] sm:$0xff] %vm559, %v540
        %574 = vst.msk [vmem:[%s248 + $0x70] sm:$0xff] %vm559, %v541
        %575 = vst.msk [vmem:[%s248 + $0x78] sm:$0xff] %vm559, %v542
        %576 = vst.msk [vmem:[%s248 + $0x80] sm:$0xff] %vm559, %v543
        %577 = vst.msk [vmem:[%s248 + $0x88] sm:$0xff] %vm559, %v544
        %578 = vst.msk [vmem:[%s248 + $0x90] sm:$0xff] %vm559, %v545
        %579 = vst.msk [vmem:[%s248 + $0x98] sm:$0xff] %vm559, %v546
        %580 = vst.msk [vmem:[%s248 + $0xa0] sm:$0xff] %vm559, %v547
        %581 = vst.msk [vmem:[%s248 + $0xa8] sm:$0xff] %vm559, %v548
        %582 = vst.msk [vmem:[%s248 + $0xb0] sm:$0xff] %vm559, %v549
        %583 = vst.msk [vmem:[%s248 + $0xb8] sm:$0xff] %vm559, %v550
        %584 = vst.msk [vmem:[%s248 + $0xc0] sm:$0xff] %vm559, %v551
        %585 = vst.msk [vmem:[%s248 + $0xc8] sm:$0xff] %vm559, %v552
        %586 = vst.msk [vmem:[%s248 + $0xd0] sm:$0xff] %vm559, %v553
        %587 = vst.msk [vmem:[%s248 + $0xd8] sm:$0xff] %vm559, %v554
        %588 = vst.msk [vmem:[%s248 + $0xe0] sm:$0xff] %vm559, %v555
        %589 = vst.msk [vmem:[%s248 + $0xe8] sm:$0xff] %vm559, %v556
        %590 = vst.msk [vmem:[%s248 + $0xf0] sm:$0xff] %vm559, %v557
        %591 = vst.msk [vmem:[%s248 + $0xf8] sm:$0xff] %vm559, %v558
        %s592 = sand.u32 %s141, 1
        %s593 = sand.u32 %s141, 1
        %s594 = smul.addr %s593, 256
        %s595 = scalar_lea.vmem [#allocation2], %s594
        // Predicated region
        $region37: #{tpu_custom_call.1} parent=35 // pred_check
          %p596 = pneg %p151
        $region38: #{tpu_custom_call.1} parent=35 // pred_check_branch
          %598 = sbr.rel (%p596) target = $region40
        $region39: #{tpu_custom_call.1} parent=35 // pred_region
          %s599 = smul.u32 32, %s19
          %s600 = ssub.s32 784, %s599
          %p601 = scmp.lt.s32.totalorder %s600, 32
          %s602 = scalar_select %p601, %s600, 32
          %s603 = smul.u32 8, %s602
          %p604 = scmp.ne.s32.totalorder 0, %s603
          %s605 = sadd.s32 %s20, %s599
          %s606 = smul.addr %s605, 8
          %s607 = scalar_lea.vmem %s4, %s606
          // Predicated region
          $region41: #{tpu_custom_call.1} parent=39 // pred_check
            %p608 = pneg %p604
          $region42: #{tpu_custom_call.1} parent=39 // pred_check_branch
            %610 = sbr.rel (%p608) target = $region44
          $region43: #{tpu_custom_call.1} parent=39 // pred_region
            // Predicated region
            $region45: #{tpu_custom_call.1} parent=43 // pred_check
              _
            $region46: #{tpu_custom_call.1} parent=43 // pred_check_branch
              %612 = sbr.rel (0) target = $region48
            $region47: #{tpu_custom_call.1} parent=43 // pred_region
              // Predicated region
              $region67: #{tpu_custom_call.1} parent=47 // pred_check
                _
              $region68: #{tpu_custom_call.1} parent=47 // pred_check_branch
                %724 = sbr.rel (0) target = $region70
              $region69: #{tpu_custom_call.1} parent=47 // pred_region
                %s725 = sshrl.u32 %s602, 5
                // While loop
                $region71: #{tpu_custom_call.1} parent=69 // loop_pre_header
                  _
                $region72: #{tpu_custom_call.1} parent=69 // loop_header
                  %s727 = sphi 0, %s729
                  %p728 = scmp.ge.s32.totalorder %s727, %s725
                  %s732 = sphi 0, %s801
                  %s733 = sphi %s595, %s804
                  %s734 = sphi %s607, %s805
                $region73: #{tpu_custom_call.1} parent=69 // loop_header_branch
                  %731 = sbr.rel (%p728) target = $region77
                $region74: #{tpu_custom_call.1} parent=69 // loop_body
                  %v735 = vld [vmem:[%s733] sm:$0xff]
                  %736 = vst [vmem:[%s734] sm:$0xff] %v735
                  %v737 = vld [vmem:[%s733 + $0x8] sm:$0xff]
                  %738 = vst [vmem:[%s734 + $0x8] sm:$0xff] %v737
                  %v739 = vld [vmem:[%s733 + $0x10] sm:$0xff]
                  %740 = vst [vmem:[%s734 + $0x10] sm:$0xff] %v739
                  %v741 = vld [vmem:[%s733 + $0x18] sm:$0xff]
                  %742 = vst [vmem:[%s734 + $0x18] sm:$0xff] %v741
                  %v743 = vld [vmem:[%s733 + $0x20] sm:$0xff]
                  %744 = vst [vmem:[%s734 + $0x20] sm:$0xff] %v743
                  %v745 = vld [vmem:[%s733 + $0x28] sm:$0xff]
                  %746 = vst [vmem:[%s734 + $0x28] sm:$0xff] %v745
                  %v747 = vld [vmem:[%s733 + $0x30] sm:$0xff]
                  %748 = vst [vmem:[%s734 + $0x30] sm:$0xff] %v747
                  %v749 = vld [vmem:[%s733 + $0x38] sm:$0xff]
                  %750 = vst [vmem:[%s734 + $0x38] sm:$0xff] %v749
                  %v751 = vld [vmem:[%s733 + $0x40] sm:$0xff]
                  %752 = vst [vmem:[%s734 + $0x40] sm:$0xff] %v751
                  %v753 = vld [vmem:[%s733 + $0x48] sm:$0xff]
                  %754 = vst [vmem:[%s734 + $0x48] sm:$0xff] %v753
                  %v755 = vld [vmem:[%s733 + $0x50] sm:$0xff]
                  %756 = vst [vmem:[%s734 + $0x50] sm:$0xff] %v755
                  %v757 = vld [vmem:[%s733 + $0x58] sm:$0xff]
                  %758 = vst [vmem:[%s734 + $0x58] sm:$0xff] %v757
                  %v759 = vld [vmem:[%s733 + $0x60] sm:$0xff]
                  %760 = vst [vmem:[%s734 + $0x60] sm:$0xff] %v759
                  %v761 = vld [vmem:[%s733 + $0x68] sm:$0xff]
                  %762 = vst [vmem:[%s734 + $0x68] sm:$0xff] %v761
                  %v763 = vld [vmem:[%s733 + $0x70] sm:$0xff]
                  %764 = vst [vmem:[%s734 + $0x70] sm:$0xff] %v763
                  %v765 = vld [vmem:[%s733 + $0x78] sm:$0xff]
                  %766 = vst [vmem:[%s734 + $0x78] sm:$0xff] %v765
                  %v767 = vld [vmem:[%s733 + $0x80] sm:$0xff]
                  %768 = vst [vmem:[%s734 + $0x80] sm:$0xff] %v767
                  %v769 = vld [vmem:[%s733 + $0x88] sm:$0xff]
                  %770 = vst [vmem:[%s734 + $0x88] sm:$0xff] %v769
                  %v771 = vld [vmem:[%s733 + $0x90] sm:$0xff]
                  %772 = vst [vmem:[%s734 + $0x90] sm:$0xff] %v771
                  %v773 = vld [vmem:[%s733 + $0x98] sm:$0xff]
                  %774 = vst [vmem:[%s734 + $0x98] sm:$0xff] %v773
                  %v775 = vld [vmem:[%s733 + $0xa0] sm:$0xff]
                  %776 = vst [vmem:[%s734 + $0xa0] sm:$0xff] %v775
                  %v777 = vld [vmem:[%s733 + $0xa8] sm:$0xff]
                  %778 = vst [vmem:[%s734 + $0xa8] sm:$0xff] %v777
                  %v779 = vld [vmem:[%s733 + $0xb0] sm:$0xff]
                  %780 = vst [vmem:[%s734 + $0xb0] sm:$0xff] %v779
                  %v781 = vld [vmem:[%s733 + $0xb8] sm:$0xff]
                  %782 = vst [vmem:[%s734 + $0xb8] sm:$0xff] %v781
                  %v783 = vld [vmem:[%s733 + $0xc0] sm:$0xff]
                  %784 = vst [vmem:[%s734 + $0xc0] sm:$0xff] %v783
                  %v785 = vld [vmem:[%s733 + $0xc8] sm:$0xff]
                  %786 = vst [vmem:[%s734 + $0xc8] sm:$0xff] %v785
                  %v787 = vld [vmem:[%s733 + $0xd0] sm:$0xff]
                  %788 = vst [vmem:[%s734 + $0xd0] sm:$0xff] %v787
                  %v789 = vld [vmem:[%s733 + $0xd8] sm:$0xff]
                  %790 = vst [vmem:[%s734 + $0xd8] sm:$0xff] %v789
                  %v791 = vld [vmem:[%s733 + $0xe0] sm:$0xff]
                  %792 = vst [vmem:[%s734 + $0xe0] sm:$0xff] %v791
                  %v793 = vld [vmem:[%s733 + $0xe8] sm:$0xff]
                  %794 = vst [vmem:[%s734 + $0xe8] sm:$0xff] %v793
                  %v795 = vld [vmem:[%s733 + $0xf0] sm:$0xff]
                  %796 = vst [vmem:[%s734 + $0xf0] sm:$0xff] %v795
                  %v797 = vld [vmem:[%s733 + $0xf8] sm:$0xff]
                  %798 = vst [vmem:[%s734 + $0xf8] sm:$0xff] %v797
                  %s799 = sadd.s32 1, %s732
                  %p800 = scmp.ge.s32.totalorder %s799, %s725
                  %s801 = scalar_select %p800, 0, %s799
                  %s802 = smul.u32 %s801, 256
                  %s803 = smul.u32 %s801, 256
                  %s804 = scalar_lea.vmem %s595, %s802 [#allocation2]
                  %s805 = scalar_lea.vmem %s607, %s803
                $region75: #{tpu_custom_call.1} parent=69 // loop_footer
                  %s729 = sadd.s32 %s727, 1
                $region76: #{tpu_custom_call.1} parent=69 // loop_footer_branch
                  %726 = sbr.rel target = $region72
                $region77: #{tpu_custom_call.1} parent=69 // loop_exit
                  _
                %s806 = sshrl.u32 %s602, 5
                %s807 = sand.u32 %s602, 31
                %s808 = smul.u32 %s806, 32
                %s809 = smul.u32 8, %s808
                %s810 = scalar_lea.vmem %s595, %s809 [#allocation2]
                %s811 = smul.u32 8, %s808
                %s812 = scalar_lea.vmem %s607, %s811
                // While loop
                $region78: #{tpu_custom_call.1} parent=69 // loop_pre_header
                  _
                $region79: #{tpu_custom_call.1} parent=69 // loop_header
                  %s814 = sphi 0, %s816
                  %p815 = scmp.ge.s32.totalorder %s814, %s807
                  %s819 = sphi 0, %s826
                  %s820 = sphi %s810, %s829
                  %s821 = sphi %s812, %s830
                $region80: #{tpu_custom_call.1} parent=69 // loop_header_branch
                  %818 = sbr.rel (%p815) target = $region84
                $region81: #{tpu_custom_call.1} parent=69 // loop_body
                  %v822 = vld [vmem:[%s820] sm:$0xff]
                  %823 = vst [vmem:[%s821] sm:$0xff] %v822
                  %s824 = sadd.s32 1, %s819
                  %p825 = scmp.ge.s32.totalorder %s824, %s807
                  %s826 = scalar_select %p825, 0, %s824
                  %s827 = smul.u32 %s826, 8
                  %s828 = smul.u32 %s826, 8
                  %s829 = scalar_lea.vmem %s810, %s827 [#allocation2]
                  %s830 = scalar_lea.vmem %s812, %s828
                $region82: #{tpu_custom_call.1} parent=69 // loop_footer
                  %s816 = sadd.s32 %s814, 1
                $region83: #{tpu_custom_call.1} parent=69 // loop_footer_branch
                  %813 = sbr.rel target = $region79
                $region84: #{tpu_custom_call.1} parent=69 // loop_exit
                  _
              $region70: #{tpu_custom_call.1} parent=47 // pred_fallthru
                _
              // Predicated region
              $region85: #{tpu_custom_call.1} parent=47 // pred_check
                _
              $region86: #{tpu_custom_call.1} parent=47 // pred_check_branch
                %832 = sbr.rel target = $region88
              $region87: #{tpu_custom_call.1} parent=47 // pred_region
                _
              $region88: #{tpu_custom_call.1} parent=47 // pred_fallthru
                _
            $region48: #{tpu_custom_call.1} parent=43 // pred_fallthru
              _
            // Predicated region
            $region49: #{tpu_custom_call.1} parent=43 // pred_check
              _
            $region50: #{tpu_custom_call.1} parent=43 // pred_check_branch
              %614 = sbr.rel target = $region52
            $region51: #{tpu_custom_call.1} parent=43 // pred_region
              %s616 = ssub.s32 256, 1
              %s617 = sshrl.u32 %s602, 5
              // While loop
              $region53: #{tpu_custom_call.1} parent=51 // loop_pre_header
                _
              $region54: #{tpu_custom_call.1} parent=51 // loop_header
                %s619 = sphi 0, %s621
                %p620 = scmp.ge.s32.totalorder %s619, %s617
                %s624 = sphi 0, %s693
                %s625 = sphi %s595, %s696
                %s626 = sphi %s607, %s697
              $region55: #{tpu_custom_call.1} parent=51 // loop_header_branch
                %623 = sbr.rel (%p620) target = $region59
              $region56: #{tpu_custom_call.1} parent=51 // loop_body
                %v627 = vld [vmem:[%s625] sm:%s616]
                %628 = vst [vmem:[%s626] sm:%s616] %v627
                %v629 = vld [vmem:[%s625 + $0x8] sm:%s616]
                %630 = vst [vmem:[%s626 + $0x8] sm:%s616] %v629
                %v631 = vld [vmem:[%s625 + $0x10] sm:%s616]
                %632 = vst [vmem:[%s626 + $0x10] sm:%s616] %v631
                %v633 = vld [vmem:[%s625 + $0x18] sm:%s616]
                %634 = vst [vmem:[%s626 + $0x18] sm:%s616] %v633
                %v635 = vld [vmem:[%s625 + $0x20] sm:%s616]
                %636 = vst [vmem:[%s626 + $0x20] sm:%s616] %v635
                %v637 = vld [vmem:[%s625 + $0x28] sm:%s616]
                %638 = vst [vmem:[%s626 + $0x28] sm:%s616] %v637
                %v639 = vld [vmem:[%s625 + $0x30] sm:%s616]
                %640 = vst [vmem:[%s626 + $0x30] sm:%s616] %v639
                %v641 = vld [vmem:[%s625 + $0x38] sm:%s616]
                %642 = vst [vmem:[%s626 + $0x38] sm:%s616] %v641
                %v643 = vld [vmem:[%s625 + $0x40] sm:%s616]
                %644 = vst [vmem:[%s626 + $0x40] sm:%s616] %v643
                %v645 = vld [vmem:[%s625 + $0x48] sm:%s616]
                %646 = vst [vmem:[%s626 + $0x48] sm:%s616] %v645
                %v647 = vld [vmem:[%s625 + $0x50] sm:%s616]
                %648 = vst [vmem:[%s626 + $0x50] sm:%s616] %v647
                %v649 = vld [vmem:[%s625 + $0x58] sm:%s616]
                %650 = vst [vmem:[%s626 + $0x58] sm:%s616] %v649
                %v651 = vld [vmem:[%s625 + $0x60] sm:%s616]
                %652 = vst [vmem:[%s626 + $0x60] sm:%s616] %v651
                %v653 = vld [vmem:[%s625 + $0x68] sm:%s616]
                %654 = vst [vmem:[%s626 + $0x68] sm:%s616] %v653
                %v655 = vld [vmem:[%s625 + $0x70] sm:%s616]
                %656 = vst [vmem:[%s626 + $0x70] sm:%s616] %v655
                %v657 = vld [vmem:[%s625 + $0x78] sm:%s616]
                %658 = vst [vmem:[%s626 + $0x78] sm:%s616] %v657
                %v659 = vld [vmem:[%s625 + $0x80] sm:%s616]
                %660 = vst [vmem:[%s626 + $0x80] sm:%s616] %v659
                %v661 = vld [vmem:[%s625 + $0x88] sm:%s616]
                %662 = vst [vmem:[%s626 + $0x88] sm:%s616] %v661
                %v663 = vld [vmem:[%s625 + $0x90] sm:%s616]
                %664 = vst [vmem:[%s626 + $0x90] sm:%s616] %v663
                %v665 = vld [vmem:[%s625 + $0x98] sm:%s616]
                %666 = vst [vmem:[%s626 + $0x98] sm:%s616] %v665
                %v667 = vld [vmem:[%s625 + $0xa0] sm:%s616]
                %668 = vst [vmem:[%s626 + $0xa0] sm:%s616] %v667
                %v669 = vld [vmem:[%s625 + $0xa8] sm:%s616]
                %670 = vst [vmem:[%s626 + $0xa8] sm:%s616] %v669
                %v671 = vld [vmem:[%s625 + $0xb0] sm:%s616]
                %672 = vst [vmem:[%s626 + $0xb0] sm:%s616] %v671
                %v673 = vld [vmem:[%s625 + $0xb8] sm:%s616]
                %674 = vst [vmem:[%s626 + $0xb8] sm:%s616] %v673
                %v675 = vld [vmem:[%s625 + $0xc0] sm:%s616]
                %676 = vst [vmem:[%s626 + $0xc0] sm:%s616] %v675
                %v677 = vld [vmem:[%s625 + $0xc8] sm:%s616]
                %678 = vst [vmem:[%s626 + $0xc8] sm:%s616] %v677
                %v679 = vld [vmem:[%s625 + $0xd0] sm:%s616]
                %680 = vst [vmem:[%s626 + $0xd0] sm:%s616] %v679
                %v681 = vld [vmem:[%s625 + $0xd8] sm:%s616]
                %682 = vst [vmem:[%s626 + $0xd8] sm:%s616] %v681
                %v683 = vld [vmem:[%s625 + $0xe0] sm:%s616]
                %684 = vst [vmem:[%s626 + $0xe0] sm:%s616] %v683
                %v685 = vld [vmem:[%s625 + $0xe8] sm:%s616]
                %686 = vst [vmem:[%s626 + $0xe8] sm:%s616] %v685
                %v687 = vld [vmem:[%s625 + $0xf0] sm:%s616]
                %688 = vst [vmem:[%s626 + $0xf0] sm:%s616] %v687
                %v689 = vld [vmem:[%s625 + $0xf8] sm:%s616]
                %690 = vst [vmem:[%s626 + $0xf8] sm:%s616] %v689
                %s691 = sadd.s32 1, %s624
                %p692 = scmp.ge.s32.totalorder %s691, %s617
                %s693 = scalar_select %p692, 0, %s691
                %s694 = smul.u32 %s693, 256
                %s695 = smul.u32 %s693, 256
                %s696 = scalar_lea.vmem %s595, %s694 [#allocation2]
                %s697 = scalar_lea.vmem %s607, %s695
              $region57: #{tpu_custom_call.1} parent=51 // loop_footer
                %s621 = sadd.s32 %s619, 1
              $region58: #{tpu_custom_call.1} parent=51 // loop_footer_branch
                %618 = sbr.rel target = $region54
              $region59: #{tpu_custom_call.1} parent=51 // loop_exit
                _
              %s698 = sshrl.u32 %s602, 5
              %s699 = sand.u32 %s602, 31
              %s700 = smul.u32 %s698, 32
              %s701 = smul.u32 8, %s700
              %s702 = scalar_lea.vmem %s595, %s701 [#allocation2]
              %s703 = smul.u32 8, %s700
              %s704 = scalar_lea.vmem %s607, %s703
              // While loop
              $region60: #{tpu_custom_call.1} parent=51 // loop_pre_header
                _
              $region61: #{tpu_custom_call.1} parent=51 // loop_header
                %s706 = sphi 0, %s708
                %p707 = scmp.ge.s32.totalorder %s706, %s699
                %s711 = sphi 0, %s718
                %s712 = sphi %s702, %s721
                %s713 = sphi %s704, %s722
              $region62: #{tpu_custom_call.1} parent=51 // loop_header_branch
                %710 = sbr.rel (%p707) target = $region66
              $region63: #{tpu_custom_call.1} parent=51 // loop_body
                %v714 = vld [vmem:[%s712] sm:%s616]
                %715 = vst [vmem:[%s713] sm:%s616] %v714
                %s716 = sadd.s32 1, %s711
                %p717 = scmp.ge.s32.totalorder %s716, %s699
                %s718 = scalar_select %p717, 0, %s716
                %s719 = smul.u32 %s718, 8
                %s720 = smul.u32 %s718, 8
                %s721 = scalar_lea.vmem %s702, %s719 [#allocation2]
                %s722 = scalar_lea.vmem %s704, %s720
              $region64: #{tpu_custom_call.1} parent=51 // loop_footer
                %s708 = sadd.s32 %s706, 1
              $region65: #{tpu_custom_call.1} parent=51 // loop_footer_branch
                %705 = sbr.rel target = $region61
              $region66: #{tpu_custom_call.1} parent=51 // loop_exit
                _
            $region52: #{tpu_custom_call.1} parent=43 // pred_fallthru
              _
          $region44: #{tpu_custom_call.1} parent=39 // pred_fallthru
            _
          %833 = vnop
        $region40: #{tpu_custom_call.1} parent=35 // pred_fallthru
          _
      $region36: #{tpu_custom_call.1} parent=5 // pred_fallthru
        _
      %p834 = scmp.le.s32.totalorder 2, %s10
      // Predicated region
      $region89: #{tpu_custom_call.1} parent=5 // pred_check
        %p835 = pneg %p834
      $region90: #{tpu_custom_call.1} parent=5 // pred_check_branch
        %837 = sbr.rel (%p835) target = $region92
      $region91: #{tpu_custom_call.1} parent=5 // pred_region
        %s838 = ssub.s32 %s10, 2
        // Predicated region
        $region93: #{tpu_custom_call.1} parent=91 // pred_check
          %p839 = pneg %p157
        $region94: #{tpu_custom_call.1} parent=91 // pred_check_branch
          %841 = sbr.rel (%p839) target = $region96
        $region95: #{tpu_custom_call.1} parent=91 // pred_region
          %s842 = sand.u32 %s142, 1
          %s843 = sand.u32 %s142, 1
          %s844 = smul.addr %s843, 256
          %s845 = scalar_lea.vmem [#allocation2], %s844
        $region96: #{tpu_custom_call.1} parent=91 // pred_fallthru
          _
      $region92: #{tpu_custom_call.1} parent=5 // pred_fallthru
        _
    $region6: #{tpu_custom_call.1} parent=1 // loop_footer
      %s14 = sadd.s32 1, %s10
    $region7: #{tpu_custom_call.1} parent=1 // loop_footer_branch
      %9 = sbr.rel target = $region3
    $region8: #{tpu_custom_call.1} parent=1 // loop_exit
      _

</llo_original>
